<compile_context>
chip_gen: v7x
topology: tpu7x:2x2x1
jax: 0.10.0
libtpu: 0.0.40
codegen_flags: <defaults>
</compile_context>

<pallas_src>
import functools

import jax
import jax.numpy as jnp
from jax import lax
from jax.experimental import pallas as pl
from jax.experimental.pallas import tpu as pltpu


def _lstm_head_kernel(x_ref, w_ih_ref, w_hh_ref, b_ref, w_lin_ref, b_lin_ref,
                      y_ref, hs_sc, *, seq_len, batch, hidden):
    """Single-invocation LSTM recurrence + Linear head.

    x_ref  : (T*B, I)     time-major rows (row = t*B + b), whole sequence in VMEM
    w_ih   : (I, 4H)      gate columns pre-permuted to [i, f, o, g]
    w_hh   : (H, 4H)      gate columns pre-permuted to [i, f, o, g]
    b_ref  : (1, 4H)      b_ih + b_hh, same column permutation
    w_lin  : (H, O_pad)   head weight, columns zero-padded to a multiple of 128
    b_lin  : (1, O_pad)
    y_ref  : (T*B, O_pad) lane-dense head output
    hs_sc  : (T*B, H)     all hidden states (head applied once after the loop)
    """
    T, B, H = seq_len, batch, hidden

    # Input projection for ALL timesteps in one MXU matmul, bias fused once.
    # Held as a value: at this size it is only a handful of vregs.
    xw = jnp.dot(x_ref[...], w_ih_ref[...],
                 preferred_element_type=jnp.float32) + b_ref[...]

    w_hh = w_hh_ref[...]  # recurrent weight loaded once, reused every step

    # PyTorch default initial state: h0 = c0 = 0. Carried in registers, not VMEM.
    h = jnp.zeros((B, H), jnp.float32)
    c = jnp.zeros((B, H), jnp.float32)

    # T is small & static -> fully unrolled straight-line recurrence (maximum LLO
    # scheduler visibility, zero per-step control-flow cost). Row offsets t*B are
    # static and sublane-aligned because B is padded to a multiple of 8.
    for t in range(T):
        row = t * B

        # Only the recurrent matmul remains inside the loop.
        gates = xw[row:row + B, :] + jnp.dot(
            h, w_hh, preferred_element_type=jnp.float32)               # (B, 4H)

        # Permuted gate order [i, f, o, g]: one sigmoid push, one tanh push.
        sig = jax.nn.sigmoid(gates[:, :3 * H])                          # i, f, o
        g_g = jnp.tanh(gates[:, 3 * H:])                                # g
        i_g = sig[:, 0 * H:1 * H]
        f_g = sig[:, 1 * H:2 * H]
        o_g = sig[:, 2 * H:3 * H]

        c = f_g * c + i_g * g_g
        h = o_g * jnp.tanh(c)

        # Off the serial chain: only the collected-hidden-states store remains.
        hs_sc[row:row + B, :] = h

    # Linear head once over all T*B rows: one well-shaped matmul + one lane-dense store.
    y_ref[...] = (jnp.dot(hs_sc[...], w_lin_ref[...],
                          preferred_element_type=jnp.float32) + b_lin_ref[...])


def _permute_gate_cols(w, hidden):
    """Reorder last-axis gate blocks from torch's [i, f, g, o] to [i, f, o, g]."""
    H = hidden
    return jnp.concatenate(
        [w[..., :2 * H], w[..., 3 * H:4 * H], w[..., 2 * H:3 * H]], axis=-1)


def simple_lstm_forward(x, params):
    """x: (B, T, I) float32. Returns (B, T, O), matching PyTorch SimpleLSTM.forward."""
    w_ih, w_hh, b_gates, w_lin, b_lin = params
    B, T, I = x.shape
    H = w_hh.shape[0]
    O = w_lin.shape[1]

    # Pad batch to the f32 sublane count (8): dense vregs / MXU rows, static aligned
    # per-timestep row slices. Padded rows are dead weight, sliced off at the end.
    B_pad = max(8, ((B + 7) // 8) * 8)
    if B_pad != B:
        x = jnp.pad(x, ((0, B_pad - B), (0, 0), (0, 0)))

    # Time-major, rows flattened to (T*B_pad, I): row index = t*B_pad + b.
    x_tm = jnp.transpose(x, (1, 0, 2)).reshape(T * B_pad, I)

    # Gate-column permutation [i,f,g,o] -> [i,f,o,g], applied identically to all three.
    w_ih_p = _permute_gate_cols(w_ih, H)
    w_hh_p = _permute_gate_cols(w_hh, H)
    b_gates_p = _permute_gate_cols(b_gates, H)

    # Lane-dense head output: pad O (and the head params' columns) to a multiple of 128.
    O_pad = max(128, ((O + 127) // 128) * 128)
    w_lin_p = jnp.pad(w_lin, ((0, 0), (0, O_pad - O)))
    b_lin_p = jnp.pad(b_lin, ((0, 0), (0, O_pad - O)))

    kernel = functools.partial(_lstm_head_kernel, seq_len=T, batch=B_pad, hidden=H)

    vmem = pl.BlockSpec(memory_space=pltpu.MemorySpace.VMEM)  # whole array in VMEM
    y2d = pl.pallas_call(
        kernel,
        out_shape=jax.ShapeDtypeStruct((T * B_pad, O_pad), jnp.float32),
        # No grid: single invocation, entire (tiny) problem resident in VMEM.
        in_specs=[vmem] * 6,
        out_specs=vmem,
        scratch_shapes=[
            pltpu.VMEM((T * B_pad, H), jnp.float32),  # all hidden states
        ],
    )(x_tm, w_ih_p, w_hh_p, b_gates_p, w_lin_p, b_lin_p)

    y = y2d[:, :O].reshape(T, B_pad, O)[:, :B, :]
    return jnp.transpose(y, (1, 0, 2))  # back to batch_first (B, T, O)


def init_params(key, input_size, hidden_size, output_size):
    """Deterministic init, same tensor semantics as torch.nn.LSTM/Linear (weights pre-transposed).

    Gate order here is torch's [i, f, g, o]; the wrapper permutes to [i, f, o, g]."""
    k = jax.random.split(key, 6)
    s = 1.0 / jnp.sqrt(hidden_size)
    # torch weight_ih_l0: (4H, I) -> stored transposed (I, 4H)
    w_ih = jax.random.uniform(k[0], (input_size, 4 * hidden_size), jnp.float32, -s, s)
    w_hh = jax.random.uniform(k[1], (hidden_size, 4 * hidden_size), jnp.float32, -s, s)
    b_ih = jax.random.uniform(k[2], (4 * hidden_size,), jnp.float32, -s, s)
    b_hh = jax.random.uniform(k[3], (4 * hidden_size,), jnp.float32, -s, s)
    b_gates = (b_ih + b_hh).reshape(1, 4 * hidden_size)
    # torch Linear: weight (O, H) -> stored transposed (H, O)
    sl = 1.0 / jnp.sqrt(hidden_size)
    w_lin = jax.random.uniform(k[4], (hidden_size, output_size), jnp.float32, -sl, sl)
    b_lin = jax.random.uniform(k[5], (1, output_size), jnp.float32, -sl, sl)
    return (w_ih, w_hh, b_gates, w_lin, b_lin)


def reference_forward(x, params):
    """Pure-JAX reference (lax.scan) replicating torch.nn.LSTM + Linear semantics."""
    w_ih, w_hh, b_gates, w_lin, b_lin = params
    B, T, I = x.shape
    H = w_hh.shape[0]

    def step(carry, x_t):
        h, c = carry
        gates = x_t @ w_ih + h @ w_hh + b_gates[0]
        i = jax.nn.sigmoid(gates[:, 0 * H:1 * H])
        f = jax.nn.sigmoid(gates[:, 1 * H:2 * H])
        g = jnp.tanh(gates[:, 2 * H:3 * H])
        o = jax.nn.sigmoid(gates[:, 3 * H:4 * H])
        c_new = f * c + i * g
        h_new = o * jnp.tanh(c_new)
        return (h_new, c_new), h_new

    h0 = jnp.zeros((B, H), jnp.float32)
    c0 = jnp.zeros((B, H), jnp.float32)
    _, hs = lax.scan(step, (h0, c0), jnp.transpose(x, (1, 0, 2)))  # (T, B, H)
    hs = jnp.transpose(hs, (1, 0, 2))  # (B, T, H)
    return hs @ w_lin + b_lin[0]


if __name__ == "__main__":
    # Small shapes implied by forward: x is (batch, seq, input_size)
    B, T, I, H, O = 2, 8, 16, 32, 8

    key = jax.random.PRNGKey(0)
    kx, kp = jax.random.split(key)
    x = jax.random.normal(kx, (B, T, I), jnp.float32)
    params = init_params(kp, I, H, O)

    y = simple_lstm_forward(x, params)
    y = jax.block_until_ready(y)

    y_ref = reference_forward(x, params)
    assert y.shape == (B, T, O)
    assert jnp.allclose(y, y_ref, atol=1e-5, rtol=1e-5), "mismatch vs pure-JAX reference"

    print("KERNEL_OK")
</pallas_src>

<mosaic_0001>
module attributes {stable_mosaic.version = 11 : i64} {
  func.func @_lstm_head_kernel(%arg0: memref<64x16xf32, #tpu.memory_space<vmem>>, %arg1: memref<16x128xf32, #tpu.memory_space<vmem>>, %arg2: memref<32x128xf32, #tpu.memory_space<vmem>>, %arg3: memref<1x128xf32, #tpu.memory_space<vmem>>, %arg4: memref<32x128xf32, #tpu.memory_space<vmem>>, %arg5: memref<1x128xf32, #tpu.memory_space<vmem>>, %arg6: memref<64x128xf32, #tpu.memory_space<vmem>>, %arg7: memref<64x32xf32, #tpu.memory_space<vmem>>) attributes {dimension_semantics = [], scalar_prefetch = 0 : i64, scratch_operands = 1 : i64, tpu.core_type = #tpu.core_type<tc>} {
    %c0 = arith.constant 0 : index
    %c0_0 = arith.constant 0 : index
    %0 = vector.load %arg0[%c0, %c0_0] : memref<64x16xf32, #tpu.memory_space<vmem>>, vector<64x16xf32>
    %c0_1 = arith.constant 0 : index
    %c0_2 = arith.constant 0 : index
    %1 = vector.load %arg1[%c0_1, %c0_2] : memref<16x128xf32, #tpu.memory_space<vmem>>, vector<16x128xf32>
    %cst = arith.constant dense<0.000000e+00> : vector<64x128xf32>
    %2 = tpu.matmul %0, %1, %cst {dimension_numbers = #tpu.dot_dimension_numbers<[1], [0], [0], [1], [0, 0, 1, 1], [], []>} : vector<64x16xf32>, vector<16x128xf32>, vector<64x128xf32> -> vector<64x128xf32>
    %c0_3 = arith.constant 0 : index
    %c0_4 = arith.constant 0 : index
    %3 = vector.load %arg3[%c0_3, %c0_4] : memref<1x128xf32, #tpu.memory_space<vmem>>, vector<1x128xf32>
    %4 = vector.broadcast %3 : vector<1x128xf32> to vector<64x128xf32>
    %5 = arith.addf %2, %4 : vector<64x128xf32>
    %c0_5 = arith.constant 0 : index
    %c0_6 = arith.constant 0 : index
    %6 = vector.load %arg2[%c0_5, %c0_6] : memref<32x128xf32, #tpu.memory_space<vmem>>, vector<32x128xf32>
    %cst_7 = arith.constant 0.000000e+00 : f32
    %7 = vector.broadcast %cst_7 : f32 to vector<8x32xf32>
    %cst_8 = arith.constant 0.000000e+00 : f32
    %8 = vector.broadcast %cst_8 : f32 to vector<8x32xf32>
    %9 = vector.extract_strided_slice %5 {offsets = [0, 0], sizes = [8, 128], strides = [1, 1]} : vector<64x128xf32> to vector<8x128xf32>
    %cst_9 = arith.constant dense<0.000000e+00> : vector<8x128xf32>
    %10 = tpu.matmul %7, %6, %cst_9 {dimension_numbers = #tpu.dot_dimension_numbers<[1], [0], [0], [1], [0, 0, 1, 1], [], []>} : vector<8x32xf32>, vector<32x128xf32>, vector<8x128xf32> -> vector<8x128xf32>
    %11 = arith.addf %9, %10 : vector<8x128xf32>
    %12 = vector.extract_strided_slice %11 {offsets = [0, 0], sizes = [8, 96], strides = [1, 1]} : vector<8x128xf32> to vector<8x96xf32>
    %13 = arith.negf %12 : vector<8x96xf32>
    %14 = math.exp %13 : vector<8x96xf32>
    %cst_10 = arith.constant 1.000000e+00 : f32
    %15 = vector.broadcast %cst_10 : f32 to vector<8x96xf32>
    %16 = arith.addf %15, %14 : vector<8x96xf32>
    %17 = arith.divf %15, %16 : vector<8x96xf32>
    %18 = vector.extract_strided_slice %11 {offsets = [0, 96], sizes = [8, 32], strides = [1, 1]} : vector<8x128xf32> to vector<8x32xf32>
    %19 = math.tanh %18 : vector<8x32xf32>
    %20 = vector.extract_strided_slice %17 {offsets = [0, 0], sizes = [8, 32], strides = [1, 1]} : vector<8x96xf32> to vector<8x32xf32>
    %21 = vector.extract_strided_slice %17 {offsets = [0, 32], sizes = [8, 32], strides = [1, 1]} : vector<8x96xf32> to vector<8x32xf32>
    %22 = vector.extract_strided_slice %17 {offsets = [0, 64], sizes = [8, 32], strides = [1, 1]} : vector<8x96xf32> to vector<8x32xf32>
    %23 = arith.mulf %21, %8 : vector<8x32xf32>
    %24 = arith.mulf %20, %19 : vector<8x32xf32>
    %25 = arith.addf %23, %24 : vector<8x32xf32>
    %26 = math.tanh %25 : vector<8x32xf32>
    %27 = arith.mulf %22, %26 : vector<8x32xf32>
    %c0_11 = arith.constant 0 : index
    %c0_12 = arith.constant 0 : index
    %28 = vector.load %arg7[%c0_11, %c0_12] : memref<64x32xf32, #tpu.memory_space<vmem>>, vector<8x32xf32>
    tpu.vector_store %arg7[%c0_11, %c0_12], %27 {strides = array<i32>} : memref<64x32xf32, #tpu.memory_space<vmem>>, vector<8x32xf32>,
    %29 = vector.extract_strided_slice %5 {offsets = [8, 0], sizes = [8, 128], strides = [1, 1]} : vector<64x128xf32> to vector<8x128xf32>
    %cst_13 = arith.constant dense<0.000000e+00> : vector<8x128xf32>
    %30 = tpu.matmul %27, %6, %cst_13 {dimension_numbers = #tpu.dot_dimension_numbers<[1], [0], [0], [1], [0, 0, 1, 1], [], []>} : vector<8x32xf32>, vector<32x128xf32>, vector<8x128xf32> -> vector<8x128xf32>
    %31 = arith.addf %29, %30 : vector<8x128xf32>
    %32 = vector.extract_strided_slice %31 {offsets = [0, 0], sizes = [8, 96], strides = [1, 1]} : vector<8x128xf32> to vector<8x96xf32>
    %33 = arith.negf %32 : vector<8x96xf32>
    %34 = math.exp %33 : vector<8x96xf32>
    %cst_14 = arith.constant 1.000000e+00 : f32
    %35 = vector.broadcast %cst_14 : f32 to vector<8x96xf32>
    %36 = arith.addf %35, %34 : vector<8x96xf32>
    %37 = arith.divf %35, %36 : vector<8x96xf32>
    %38 = vector.extract_strided_slice %31 {offsets = [0, 96], sizes = [8, 32], strides = [1, 1]} : vector<8x128xf32> to vector<8x32xf32>
    %39 = math.tanh %38 : vector<8x32xf32>
    %40 = vector.extract_strided_slice %37 {offsets = [0, 0], sizes = [8, 32], strides = [1, 1]} : vector<8x96xf32> to vector<8x32xf32>
    %41 = vector.extract_strided_slice %37 {offsets = [0, 32], sizes = [8, 32], strides = [1, 1]} : vector<8x96xf32> to vector<8x32xf32>
    %42 = vector.extract_strided_slice %37 {offsets = [0, 64], sizes = [8, 32], strides = [1, 1]} : vector<8x96xf32> to vector<8x32xf32>
    %43 = arith.mulf %41, %25 : vector<8x32xf32>
    %44 = arith.mulf %40, %39 : vector<8x32xf32>
    %45 = arith.addf %43, %44 : vector<8x32xf32>
    %46 = math.tanh %45 : vector<8x32xf32>
    %47 = arith.mulf %42, %46 : vector<8x32xf32>
    %c8 = arith.constant 8 : index
    %c0_15 = arith.constant 0 : index
    %48 = vector.load %arg7[%c8, %c0_15] : memref<64x32xf32, #tpu.memory_space<vmem>>, vector<8x32xf32>
    tpu.vector_store %arg7[%c8, %c0_15], %47 {strides = array<i32>} : memref<64x32xf32, #tpu.memory_space<vmem>>, vector<8x32xf32>,
    %49 = vector.extract_strided_slice %5 {offsets = [16, 0], sizes = [8, 128], strides = [1, 1]} : vector<64x128xf32> to vector<8x128xf32>
    %cst_16 = arith.constant dense<0.000000e+00> : vector<8x128xf32>
    %50 = tpu.matmul %47, %6, %cst_16 {dimension_numbers = #tpu.dot_dimension_numbers<[1], [0], [0], [1], [0, 0, 1, 1], [], []>} : vector<8x32xf32>, vector<32x128xf32>, vector<8x128xf32> -> vector<8x128xf32>
    %51 = arith.addf %49, %50 : vector<8x128xf32>
    %52 = vector.extract_strided_slice %51 {offsets = [0, 0], sizes = [8, 96], strides = [1, 1]} : vector<8x128xf32> to vector<8x96xf32>
    %53 = arith.negf %52 : vector<8x96xf32>
    %54 = math.exp %53 : vector<8x96xf32>
    %cst_17 = arith.constant 1.000000e+00 : f32
    %55 = vector.broadcast %cst_17 : f32 to vector<8x96xf32>
    %56 = arith.addf %55, %54 : vector<8x96xf32>
    %57 = arith.divf %55, %56 : vector<8x96xf32>
    %58 = vector.extract_strided_slice %51 {offsets = [0, 96], sizes = [8, 32], strides = [1, 1]} : vector<8x128xf32> to vector<8x32xf32>
    %59 = math.tanh %58 : vector<8x32xf32>
    %60 = vector.extract_strided_slice %57 {offsets = [0, 0], sizes = [8, 32], strides = [1, 1]} : vector<8x96xf32> to vector<8x32xf32>
    %61 = vector.extract_strided_slice %57 {offsets = [0, 32], sizes = [8, 32], strides = [1, 1]} : vector<8x96xf32> to vector<8x32xf32>
    %62 = vector.extract_strided_slice %57 {offsets = [0, 64], sizes = [8, 32], strides = [1, 1]} : vector<8x96xf32> to vector<8x32xf32>
    %63 = arith.mulf %61, %45 : vector<8x32xf32>
    %64 = arith.mulf %60, %59 : vector<8x32xf32>
    %65 = arith.addf %63, %64 : vector<8x32xf32>
    %66 = math.tanh %65 : vector<8x32xf32>
    %67 = arith.mulf %62, %66 : vector<8x32xf32>
    %c16 = arith.constant 16 : index
    %c0_18 = arith.constant 0 : index
    %68 = vector.load %arg7[%c16, %c0_18] : memref<64x32xf32, #tpu.memory_space<vmem>>, vector<8x32xf32>
    tpu.vector_store %arg7[%c16, %c0_18], %67 {strides = array<i32>} : memref<64x32xf32, #tpu.memory_space<vmem>>, vector<8x32xf32>,
    %69 = vector.extract_strided_slice %5 {offsets = [24, 0], sizes = [8, 128], strides = [1, 1]} : vector<64x128xf32> to vector<8x128xf32>
    %cst_19 = arith.constant dense<0.000000e+00> : vector<8x128xf32>
    %70 = tpu.matmul %67, %6, %cst_19 {dimension_numbers = #tpu.dot_dimension_numbers<[1], [0], [0], [1], [0, 0, 1, 1], [], []>} : vector<8x32xf32>, vector<32x128xf32>, vector<8x128xf32> -> vector<8x128xf32>
    %71 = arith.addf %69, %70 : vector<8x128xf32>
    %72 = vector.extract_strided_slice %71 {offsets = [0, 0], sizes = [8, 96], strides = [1, 1]} : vector<8x128xf32> to vector<8x96xf32>
    %73 = arith.negf %72 : vector<8x96xf32>
    %74 = math.exp %73 : vector<8x96xf32>
    %cst_20 = arith.constant 1.000000e+00 : f32
    %75 = vector.broadcast %cst_20 : f32 to vector<8x96xf32>
    %76 = arith.addf %75, %74 : vector<8x96xf32>
    %77 = arith.divf %75, %76 : vector<8x96xf32>
    %78 = vector.extract_strided_slice %71 {offsets = [0, 96], sizes = [8, 32], strides = [1, 1]} : vector<8x128xf32> to vector<8x32xf32>
    %79 = math.tanh %78 : vector<8x32xf32>
    %80 = vector.extract_strided_slice %77 {offsets = [0, 0], sizes = [8, 32], strides = [1, 1]} : vector<8x96xf32> to vector<8x32xf32>
    %81 = vector.extract_strided_slice %77 {offsets = [0, 32], sizes = [8, 32], strides = [1, 1]} : vector<8x96xf32> to vector<8x32xf32>
    %82 = vector.extract_strided_slice %77 {offsets = [0, 64], sizes = [8, 32], strides = [1, 1]} : vector<8x96xf32> to vector<8x32xf32>
    %83 = arith.mulf %81, %65 : vector<8x32xf32>
    %84 = arith.mulf %80, %79 : vector<8x32xf32>
    %85 = arith.addf %83, %84 : vector<8x32xf32>
    %86 = math.tanh %85 : vector<8x32xf32>
    %87 = arith.mulf %82, %86 : vector<8x32xf32>
    %c24 = arith.constant 24 : index
    %c0_21 = arith.constant 0 : index
    %88 = vector.load %arg7[%c24, %c0_21] : memref<64x32xf32, #tpu.memory_space<vmem>>, vector<8x32xf32>
    tpu.vector_store %arg7[%c24, %c0_21], %87 {strides = array<i32>} : memref<64x32xf32, #tpu.memory_space<vmem>>, vector<8x32xf32>,
    %89 = vector.extract_strided_slice %5 {offsets = [32, 0], sizes = [8, 128], strides = [1, 1]} : vector<64x128xf32> to vector<8x128xf32>
    %cst_22 = arith.constant dense<0.000000e+00> : vector<8x128xf32>
    %90 = tpu.matmul %87, %6, %cst_22 {dimension_numbers = #tpu.dot_dimension_numbers<[1], [0], [0], [1], [0, 0, 1, 1], [], []>} : vector<8x32xf32>, vector<32x128xf32>, vector<8x128xf32> -> vector<8x128xf32>
    %91 = arith.addf %89, %90 : vector<8x128xf32>
    %92 = vector.extract_strided_slice %91 {offsets = [0, 0], sizes = [8, 96], strides = [1, 1]} : vector<8x128xf32> to vector<8x96xf32>
    %93 = arith.negf %92 : vector<8x96xf32>
    %94 = math.exp %93 : vector<8x96xf32>
    %cst_23 = arith.constant 1.000000e+00 : f32
    %95 = vector.broadcast %cst_23 : f32 to vector<8x96xf32>
    %96 = arith.addf %95, %94 : vector<8x96xf32>
    %97 = arith.divf %95, %96 : vector<8x96xf32>
    %98 = vector.extract_strided_slice %91 {offsets = [0, 96], sizes = [8, 32], strides = [1, 1]} : vector<8x128xf32> to vector<8x32xf32>
    %99 = math.tanh %98 : vector<8x32xf32>
    %100 = vector.extract_strided_slice %97 {offsets = [0, 0], sizes = [8, 32], strides = [1, 1]} : vector<8x96xf32> to vector<8x32xf32>
    %101 = vector.extract_strided_slice %97 {offsets = [0, 32], sizes = [8, 32], strides = [1, 1]} : vector<8x96xf32> to vector<8x32xf32>
    %102 = vector.extract_strided_slice %97 {offsets = [0, 64], sizes = [8, 32], strides = [1, 1]} : vector<8x96xf32> to vector<8x32xf32>
    %103 = arith.mulf %101, %85 : vector<8x32xf32>
    %104 = arith.mulf %100, %99 : vector<8x32xf32>
    %105 = arith.addf %103, %104 : vector<8x32xf32>
    %106 = math.tanh %105 : vector<8x32xf32>
    %107 = arith.mulf %102, %106 : vector<8x32xf32>
    %c32 = arith.constant 32 : index
    %c0_24 = arith.constant 0 : index
    %108 = vector.load %arg7[%c32, %c0_24] : memref<64x32xf32, #tpu.memory_space<vmem>>, vector<8x32xf32>
    tpu.vector_store %arg7[%c32, %c0_24], %107 {strides = array<i32>} : memref<64x32xf32, #tpu.memory_space<vmem>>, vector<8x32xf32>,
    %109 = vector.extract_strided_slice %5 {offsets = [40, 0], sizes = [8, 128], strides = [1, 1]} : vector<64x128xf32> to vector<8x128xf32>
    %cst_25 = arith.constant dense<0.000000e+00> : vector<8x128xf32>
    %110 = tpu.matmul %107, %6, %cst_25 {dimension_numbers = #tpu.dot_dimension_numbers<[1], [0], [0], [1], [0, 0, 1, 1], [], []>} : vector<8x32xf32>, vector<32x128xf32>, vector<8x128xf32> -> vector<8x128xf32>
    %111 = arith.addf %109, %110 : vector<8x128xf32>
    %112 = vector.extract_strided_slice %111 {offsets = [0, 0], sizes = [8, 96], strides = [1, 1]} : vector<8x128xf32> to vector<8x96xf32>
    %113 = arith.negf %112 : vector<8x96xf32>
    %114 = math.exp %113 : vector<8x96xf32>
    %cst_26 = arith.constant 1.000000e+00 : f32
    %115 = vector.broadcast %cst_26 : f32 to vector<8x96xf32>
    %116 = arith.addf %115, %114 : vector<8x96xf32>
    %117 = arith.divf %115, %116 : vector<8x96xf32>
    %118 = vector.extract_strided_slice %111 {offsets = [0, 96], sizes = [8, 32], strides = [1, 1]} : vector<8x128xf32> to vector<8x32xf32>
    %119 = math.tanh %118 : vector<8x32xf32>
    %120 = vector.extract_strided_slice %117 {offsets = [0, 0], sizes = [8, 32], strides = [1, 1]} : vector<8x96xf32> to vector<8x32xf32>
    %121 = vector.extract_strided_slice %117 {offsets = [0, 32], sizes = [8, 32], strides = [1, 1]} : vector<8x96xf32> to vector<8x32xf32>
    %122 = vector.extract_strided_slice %117 {offsets = [0, 64], sizes = [8, 32], strides = [1, 1]} : vector<8x96xf32> to vector<8x32xf32>
    %123 = arith.mulf %121, %105 : vector<8x32xf32>
    %124 = arith.mulf %120, %119 : vector<8x32xf32>
    %125 = arith.addf %123, %124 : vector<8x32xf32>
    %126 = math.tanh %125 : vector<8x32xf32>
    %127 = arith.mulf %122, %126 : vector<8x32xf32>
    %c40 = arith.constant 40 : index
    %c0_27 = arith.constant 0 : index
    %128 = vector.load %arg7[%c40, %c0_27] : memref<64x32xf32, #tpu.memory_space<vmem>>, vector<8x32xf32>
    tpu.vector_store %arg7[%c40, %c0_27], %127 {strides = array<i32>} : memref<64x32xf32, #tpu.memory_space<vmem>>, vector<8x32xf32>,
    %129 = vector.extract_strided_slice %5 {offsets = [48, 0], sizes = [8, 128], strides = [1, 1]} : vector<64x128xf32> to vector<8x128xf32>
    %cst_28 = arith.constant dense<0.000000e+00> : vector<8x128xf32>
    %130 = tpu.matmul %127, %6, %cst_28 {dimension_numbers = #tpu.dot_dimension_numbers<[1], [0], [0], [1], [0, 0, 1, 1], [], []>} : vector<8x32xf32>, vector<32x128xf32>, vector<8x128xf32> -> vector<8x128xf32>
    %131 = arith.addf %129, %130 : vector<8x128xf32>
    %132 = vector.extract_strided_slice %131 {offsets = [0, 0], sizes = [8, 96], strides = [1, 1]} : vector<8x128xf32> to vector<8x96xf32>
    %133 = arith.negf %132 : vector<8x96xf32>
    %134 = math.exp %133 : vector<8x96xf32>
    %cst_29 = arith.constant 1.000000e+00 : f32
    %135 = vector.broadcast %cst_29 : f32 to vector<8x96xf32>
    %136 = arith.addf %135, %134 : vector<8x96xf32>
    %137 = arith.divf %135, %136 : vector<8x96xf32>
    %138 = vector.extract_strided_slice %131 {offsets = [0, 96], sizes = [8, 32], strides = [1, 1]} : vector<8x128xf32> to vector<8x32xf32>
    %139 = math.tanh %138 : vector<8x32xf32>
    %140 = vector.extract_strided_slice %137 {offsets = [0, 0], sizes = [8, 32], strides = [1, 1]} : vector<8x96xf32> to vector<8x32xf32>
    %141 = vector.extract_strided_slice %137 {offsets = [0, 32], sizes = [8, 32], strides = [1, 1]} : vector<8x96xf32> to vector<8x32xf32>
    %142 = vector.extract_strided_slice %137 {offsets = [0, 64], sizes = [8, 32], strides = [1, 1]} : vector<8x96xf32> to vector<8x32xf32>
    %143 = arith.mulf %141, %125 : vector<8x32xf32>
    %144 = arith.mulf %140, %139 : vector<8x32xf32>
    %145 = arith.addf %143, %144 : vector<8x32xf32>
    %146 = math.tanh %145 : vector<8x32xf32>
    %147 = arith.mulf %142, %146 : vector<8x32xf32>
    %c48 = arith.constant 48 : index
    %c0_30 = arith.constant 0 : index
    %148 = vector.load %arg7[%c48, %c0_30] : memref<64x32xf32, #tpu.memory_space<vmem>>, vector<8x32xf32>
    tpu.vector_store %arg7[%c48, %c0_30], %147 {strides = array<i32>} : memref<64x32xf32, #tpu.memory_space<vmem>>, vector<8x32xf32>,
    %149 = vector.extract_strided_slice %5 {offsets = [56, 0], sizes = [8, 128], strides = [1, 1]} : vector<64x128xf32> to vector<8x128xf32>
    %cst_31 = arith.constant dense<0.000000e+00> : vector<8x128xf32>
    %150 = tpu.matmul %147, %6, %cst_31 {dimension_numbers = #tpu.dot_dimension_numbers<[1], [0], [0], [1], [0, 0, 1, 1], [], []>} : vector<8x32xf32>, vector<32x128xf32>, vector<8x128xf32> -> vector<8x128xf32>
    %151 = arith.addf %149, %150 : vector<8x128xf32>
    %152 = vector.extract_strided_slice %151 {offsets = [0, 0], sizes = [8, 96], strides = [1, 1]} : vector<8x128xf32> to vector<8x96xf32>
    %153 = arith.negf %152 : vector<8x96xf32>
    %154 = math.exp %153 : vector<8x96xf32>
    %cst_32 = arith.constant 1.000000e+00 : f32
    %155 = vector.broadcast %cst_32 : f32 to vector<8x96xf32>
    %156 = arith.addf %155, %154 : vector<8x96xf32>
    %157 = arith.divf %155, %156 : vector<8x96xf32>
    %158 = vector.extract_strided_slice %151 {offsets = [0, 96], sizes = [8, 32], strides = [1, 1]} : vector<8x128xf32> to vector<8x32xf32>
    %159 = math.tanh %158 : vector<8x32xf32>
    %160 = vector.extract_strided_slice %157 {offsets = [0, 0], sizes = [8, 32], strides = [1, 1]} : vector<8x96xf32> to vector<8x32xf32>
    %161 = vector.extract_strided_slice %157 {offsets = [0, 32], sizes = [8, 32], strides = [1, 1]} : vector<8x96xf32> to vector<8x32xf32>
    %162 = vector.extract_strided_slice %157 {offsets = [0, 64], sizes = [8, 32], strides = [1, 1]} : vector<8x96xf32> to vector<8x32xf32>
    %163 = arith.mulf %161, %145 : vector<8x32xf32>
    %164 = arith.mulf %160, %159 : vector<8x32xf32>
    %165 = arith.addf %163, %164 : vector<8x32xf32>
    %166 = math.tanh %165 : vector<8x32xf32>
    %167 = arith.mulf %162, %166 : vector<8x32xf32>
    %c56 = arith.constant 56 : index
    %c0_33 = arith.constant 0 : index
    %168 = vector.load %arg7[%c56, %c0_33] : memref<64x32xf32, #tpu.memory_space<vmem>>, vector<8x32xf32>
    tpu.vector_store %arg7[%c56, %c0_33], %167 {strides = array<i32>} : memref<64x32xf32, #tpu.memory_space<vmem>>, vector<8x32xf32>,
    %c0_34 = arith.constant 0 : index
    %c0_35 = arith.constant 0 : index
    %169 = vector.load %arg7[%c0_34, %c0_35] : memref<64x32xf32, #tpu.memory_space<vmem>>, vector<64x32xf32>
    %c0_36 = arith.constant 0 : index
    %c0_37 = arith.constant 0 : index
    %170 = vector.load %arg4[%c0_36, %c0_37] : memref<32x128xf32, #tpu.memory_space<vmem>>, vector<32x128xf32>
    %cst_38 = arith.constant dense<0.000000e+00> : vector<64x128xf32>
    %171 = tpu.matmul %169, %170, %cst_38 {dimension_numbers = #tpu.dot_dimension_numbers<[1], [0], [0], [1], [0, 0, 1, 1], [], []>} : vector<64x32xf32>, vector<32x128xf32>, vector<64x128xf32> -> vector<64x128xf32>
    %c0_39 = arith.constant 0 : index
    %c0_40 = arith.constant 0 : index
    %172 = vector.load %arg5[%c0_39, %c0_40] : memref<1x128xf32, #tpu.memory_space<vmem>>, vector<1x128xf32>
    %173 = vector.broadcast %172 : vector<1x128xf32> to vector<64x128xf32>
    %174 = arith.addf %171, %173 : vector<64x128xf32>
    %c0_41 = arith.constant 0 : index
    %c0_42 = arith.constant 0 : index
    %175 = vector.load %arg6[%c0_41, %c0_42] : memref<64x128xf32, #tpu.memory_space<vmem>>, vector<64x128xf32>
    tpu.vector_store %arg6[%c0_41, %c0_42], %174 {strides = array<i32>} : memref<64x128xf32, #tpu.memory_space<vmem>>, vector<64x128xf32>,
    return
  }
}

</mosaic_0001>

<llo_original>
// kernel: tpu_custom_call.1
$region0: #{tpu_custom_call.1}
  #allocation0 [shape = 'u32[]', space=smem, size = 0x4, offset = 0x4, fixed_abs, tag = 'smem constant byte address 0x4 - core index']
  #allocation1 [shape = 'u32[144,128]{1,0:T(1,128)}', space=vmem, size = 0x12000, scoped, tag = 'internal scratch']
  #allocation2 [shape = 'f32[64,32]{1,0:T(8,128)}', space=vmem, size = 0x8000, scoped, tag = 'scratch operand']
  %s0 = inlined_call_operand.vmem [shape: f32[64,16], index: 0, kind: input, shape index: {}]
  %s1 = inlined_call_operand.vmem [shape: f32[16,128], index: 1, kind: input, shape index: {}]
  %s2 = inlined_call_operand.vmem [shape: f32[32,128], index: 2, kind: input, shape index: {}]
  %s3 = inlined_call_operand.vmem [shape: f32[1,128], index: 3, kind: input, shape index: {}]
  %s4 = inlined_call_operand.vmem [shape: f32[32,128], index: 4, kind: input, shape index: {}]
  %s5 = inlined_call_operand.vmem [shape: f32[1,128], index: 5, kind: input, shape index: {}]
  %s6 = inlined_call_operand.hbm [shape: f32[64,128], index: 6, kind: output, shape index: {}]
  %s7 = sld [smem:[#allocation0]]
  $region34: #{tpu_custom_call.1} parent=0
    _
  %s9 = ssub.s32 1, %s7
  %s10 = scalar_select 0, %s9, %s7
  $region1: #{tpu_custom_call.1} parent=0
    #allocation3 [shape = 'u8[32768]{0}', space=vmem, size = 0x8000, scoped, tag = 'output window, operand 0, single buffered']
    #allocation4 [shape = 's32[1]{0}', space=sflag, size = 0x4, scoped, tag = 'scoped memory for tpu_custom_call.1']
    %11 = vsyncpa [#allocation4], 0
    // Predicated region
    $region2: #{tpu_custom_call.1} parent=1 // pred_check
      _
    $region3: #{tpu_custom_call.1} parent=1 // pred_check_branch
      %13 = sbr.rel (0) target = $region5
    $region4: #{tpu_custom_call.1} parent=1 // pred_region
      _
    $region5: #{tpu_custom_call.1} parent=1 // pred_fallthru
      _
    // Predicated region
    $region6: #{tpu_custom_call.1} parent=1 // pred_check
      _
    $region7: #{tpu_custom_call.1} parent=1 // pred_check_branch
      %15 = sbr.rel (0) target = $region9
    $region8: #{tpu_custom_call.1} parent=1 // pred_region
      _
    $region9: #{tpu_custom_call.1} parent=1 // pred_fallthru
      _
    // Predicated region
    $region10: #{tpu_custom_call.1} parent=1 // pred_check
      _
    $region11: #{tpu_custom_call.1} parent=1 // pred_check_branch
      %17 = sbr.rel (0) target = $region13
    $region12: #{tpu_custom_call.1} parent=1 // pred_region
      _
    $region13: #{tpu_custom_call.1} parent=1 // pred_fallthru
      _
    // Predicated region
    $region14: #{tpu_custom_call.1} parent=1 // pred_check
      _
    $region15: #{tpu_custom_call.1} parent=1 // pred_check_branch
      %19 = sbr.rel (0) target = $region17
    $region16: #{tpu_custom_call.1} parent=1 // pred_region
      _
    $region17: #{tpu_custom_call.1} parent=1 // pred_fallthru
      _
    // Predicated region
    $region18: #{tpu_custom_call.1} parent=1 // pred_check
      _
    $region19: #{tpu_custom_call.1} parent=1 // pred_check_branch
      %21 = sbr.rel (0) target = $region21
    $region20: #{tpu_custom_call.1} parent=1 // pred_region
      _
    $region21: #{tpu_custom_call.1} parent=1 // pred_fallthru
      _
    // Predicated region
    $region22: #{tpu_custom_call.1} parent=1 // pred_check
      _
    $region23: #{tpu_custom_call.1} parent=1 // pred_check_branch
      %23 = sbr.rel (0) target = $region25
    $region24: #{tpu_custom_call.1} parent=1 // pred_region
      _
    $region25: #{tpu_custom_call.1} parent=1 // pred_fallthru
      _
    %v24 = vld [vmem:[%s0] sm:$0xff]
    %v25 = vld [vmem:[%s0 + $0x8] sm:$0xff]
    %v26 = vld [vmem:[%s0 + $0x10] sm:$0xff]
    %v27 = vld [vmem:[%s0 + $0x18] sm:$0xff]
    %v28 = vld [vmem:[%s0 + $0x20] sm:$0xff]
    %v29 = vld [vmem:[%s0 + $0x28] sm:$0xff]
    %v30 = vld [vmem:[%s0 + $0x30] sm:$0xff]
    %v31 = vld [vmem:[%s0 + $0x38] sm:$0xff]
    %v32 = vld [vmem:[%s1] sm:$0xff]
    %v33 = vld [vmem:[%s1 + $0x8] sm:$0xff]
    %v34 = vld [vmem:[%s3] sm:$0x1]
    %v36 = vlaneseq
    %v37 = vshrl.u32 %v36, 7
    %v38 = vsub.s32 0, %v37
    %v39 = vrot.slane %v34, %v38
    %vm41 = vcmask 130048
    %v43 = vsel %vm41, %v24, 0
    %v46 = vsel %vm41, %v25, 0
    %v49 = vsel %vm41, %v26, 0
    %v52 = vsel %vm41, %v27, 0
    %v55 = vsel %vm41, %v28, 0
    %v58 = vsel %vm41, %v29, 0
    %v61 = vsel %vm41, %v30, 0
    %v64 = vsel %vm41, %v31, 0
    %66 = vmatprep.subr.mxu0 0.0
    %67 = vmatpush1.msra.mxu0 %v32
    %68 = vmatprep.subr.mxu0 0.0
    %69 = vmatpush1.msra.mxu0 %v33
    %70 = vmatprep.subr.mxu0 0.0
    %71 = vmatpush1.msra.mxu0 0.0
    %72 = vmatprep.subr.mxu0 0.0
    %73 = vmatpush1.msra.mxu0 0.0
    %74 = vmatprep.subr.mxu0 0.0
    %75 = vmatpush1.msra.mxu0 0.0
    %76 = vmatprep.subr.mxu0 0.0
    %77 = vmatpush1.msra.mxu0 0.0
    %78 = vmatprep.subr.mxu0 0.0
    %79 = vmatpush1.msra.mxu0 0.0
    %80 = vmatprep.subr.mxu0 0.0
    %81 = vmatpush1.msra.mxu0 0.0
    %82 = vmatprep.subr.mxu0 0.0
    %83 = vmatpush1.msra.mxu0 0.0
    %84 = vmatprep.subr.mxu0 0.0
    %85 = vmatpush1.msra.mxu0 0.0
    %86 = vmatprep.subr.mxu0 0.0
    %87 = vmatpush1.msra.mxu0 0.0
    %88 = vmatprep.subr.mxu0 0.0
    %89 = vmatpush1.msra.mxu0 0.0
    %90 = vmatprep.subr.mxu0 0.0
    %91 = vmatpush1.msra.mxu0 0.0
    %92 = vmatprep.subr.mxu0 0.0
    %93 = vmatpush1.msra.mxu0 0.0
    %94 = vmatprep.subr.mxu0 0.0
    %95 = vmatpush1.msra.mxu0 0.0
    %96 = vmatprep.subr.mxu0 0.0
    %97 = vmatpush1.msra.mxu0 0.0
    %98 = vmatprep.subr.mxu0 0.0
    %99 = vmatpush1.msra.mxu0 0.0
    %100 = vmatprep.subr.mxu0 0.0
    %101 = vmatpush1.msra.mxu0 0.0
    %102 = vmatprep.subr.mxu0 0.0
    %103 = vmatpush1.msra.mxu0 0.0
    %104 = vmatprep.subr.mxu0 0.0
    %105 = vmatpush1.msra.mxu0 0.0
    %106 = vmatprep.subr.mxu0 0.0
    %107 = vmatpush1.msra.mxu0 0.0
    %108 = vmatprep.subr.mxu0 0.0
    %109 = vmatpush1.msra.mxu0 0.0
    %110 = vmatprep.subr.mxu0 0.0
    %111 = vmatpush1.msra.mxu0 0.0
    %112 = vmatprep.subr.mxu0 0.0
    %113 = vmatpush1.msra.mxu0 0.0
    %114 = vmatprep.subr.mxu0 0.0
    %115 = vmatpush1.msra.mxu0 0.0
    %116 = vmatprep.subr.mxu0 0.0
    %117 = vmatpush1.msra.mxu0 0.0
    %118 = vmatprep.subr.mxu0 0.0
    %119 = vmatpush1.msra.mxu0 0.0
    %120 = vmatprep.subr.mxu0 0.0
    %121 = vmatpush1.msra.mxu0 0.0
    %122 = vmatprep.subr.mxu0 0.0
    %123 = vmatpush1.msra.mxu0 0.0
    %124 = vmatprep.subr.mxu0 0.0
    %125 = vmatpush1.msra.mxu0 0.0
    %126 = vmatprep.subr.mxu0 0.0
    %127 = vmatpush1.msra.mxu0 0.0
    %128 = vmatprep.subr.mxu0 0.0
    %129 = vmatpush1.msra.mxu0 0.0
    %130 = vmatprep.mubr.f32.mxu0 0.0
    %131 = vmatmul.mubr.f32.gmra.mrb[0].mxu0 %v43
    %v132 = vpop.f32.mrb[0].mxu0
    %v133 = vadd.f32 %v39, %v132
    %v134 = vpop.f32.mrb[0].mxu0
    %135 = vmatprep.mubr.f32.mxu0 0.0
    %136 = vmatmul.mubr.f32.gmra.mrb[0].mxu0 %v46
    %v137 = vpop.f32.mrb[0].mxu0
    %v138 = vadd.f32 %v39, %v137
    %v139 = vpop.f32.mrb[0].mxu0
    %140 = vmatprep.mubr.f32.mxu0 0.0
    %141 = vmatmul.mubr.f32.gmra.mrb[0].mxu0 %v49
    %v142 = vpop.f32.mrb[0].mxu0
    %v143 = vadd.f32 %v39, %v142
    %v144 = vpop.f32.mrb[0].mxu0
    %145 = vmatprep.mubr.f32.mxu0 0.0
    %146 = vmatmul.mubr.f32.gmra.mrb[0].mxu0 %v52
    %v147 = vpop.f32.mrb[0].mxu0
    %v148 = vadd.f32 %v39, %v147
    %v149 = vpop.f32.mrb[0].mxu0
    %150 = vmatprep.mubr.f32.mxu0 0.0
    %151 = vmatmul.mubr.f32.gmra.mrb[0].mxu0 %v55
    %v152 = vpop.f32.mrb[0].mxu0
    %v153 = vadd.f32 %v39, %v152
    %v154 = vpop.f32.mrb[0].mxu0
    %155 = vmatprep.mubr.f32.mxu0 0.0
    %156 = vmatmul.mubr.f32.gmra.mrb[0].mxu0 %v58
    %v157 = vpop.f32.mrb[0].mxu0
    %v158 = vadd.f32 %v39, %v157
    %v159 = vpop.f32.mrb[0].mxu0
    %160 = vmatprep.mubr.f32.mxu0 0.0
    %161 = vmatmul.mubr.f32.gmra.mrb[0].mxu0 %v61
    %v162 = vpop.f32.mrb[0].mxu0
    %v163 = vadd.f32 %v39, %v162
    %v164 = vpop.f32.mrb[0].mxu0
    %165 = vmatprep.mubr.f32.mxu0 0.0
    %166 = vmatmul.mubr.f32.gmra.mrb[0].mxu0 %v64
    %v167 = vpop.f32.mrb[0].mxu0
    %v168 = vadd.f32 %v39, %v167
    %v169 = vpop.f32.mrb[0].mxu0
    %170 = vdwg.mxu0
    %v171 = vld [vmem:[%s2] sm:$0xff]
    %v172 = vld [vmem:[%s2 + $0x8] sm:$0xff]
    %v173 = vld [vmem:[%s2 + $0x10] sm:$0xff]
    %v174 = vld [vmem:[%s2 + $0x18] sm:$0xff]
    %vm175 = vcmask 261120
    %v177 = vsel %vm175, 0.0, 0
    %179 = vmatprep.subr.mxu0 0.0
    %180 = vmatpush1.msra.mxu0 %v171
    %181 = vmatprep.subr.mxu0 0.0
    %182 = vmatpush1.msra.mxu0 %v172
    %183 = vmatprep.subr.mxu0 0.0
    %184 = vmatpush1.msra.mxu0 %v173
    %185 = vmatprep.subr.mxu0 0.0
    %186 = vmatpush1.msra.mxu0 %v174
    %187 = vmatprep.subr.mxu0 0.0
    %188 = vmatpush1.msra.mxu0 0.0
    %189 = vmatprep.subr.mxu0 0.0
    %190 = vmatpush1.msra.mxu0 0.0
    %191 = vmatprep.subr.mxu0 0.0
    %192 = vmatpush1.msra.mxu0 0.0
    %193 = vmatprep.subr.mxu0 0.0
    %194 = vmatpush1.msra.mxu0 0.0
    %195 = vmatprep.subr.mxu0 0.0
    %196 = vmatpush1.msra.mxu0 0.0
    %197 = vmatprep.subr.mxu0 0.0
    %198 = vmatpush1.msra.mxu0 0.0
    %199 = vmatprep.subr.mxu0 0.0
    %200 = vmatpush1.msra.mxu0 0.0
    %201 = vmatprep.subr.mxu0 0.0
    %202 = vmatpush1.msra.mxu0 0.0
    %203 = vmatprep.subr.mxu0 0.0
    %204 = vmatpush1.msra.mxu0 0.0
    %205 = vmatprep.subr.mxu0 0.0
    %206 = vmatpush1.msra.mxu0 0.0
    %207 = vmatprep.subr.mxu0 0.0
    %208 = vmatpush1.msra.mxu0 0.0
    %209 = vmatprep.subr.mxu0 0.0
    %210 = vmatpush1.msra.mxu0 0.0
    %211 = vmatprep.subr.mxu0 0.0
    %212 = vmatpush1.msra.mxu0 0.0
    %213 = vmatprep.subr.mxu0 0.0
    %214 = vmatpush1.msra.mxu0 0.0
    %215 = vmatprep.subr.mxu0 0.0
    %216 = vmatpush1.msra.mxu0 0.0
    %217 = vmatprep.subr.mxu0 0.0
    %218 = vmatpush1.msra.mxu0 0.0
    %219 = vmatprep.subr.mxu0 0.0
    %220 = vmatpush1.msra.mxu0 0.0
    %221 = vmatprep.subr.mxu0 0.0
    %222 = vmatpush1.msra.mxu0 0.0
    %223 = vmatprep.subr.mxu0 0.0
    %224 = vmatpush1.msra.mxu0 0.0
    %225 = vmatprep.subr.mxu0 0.0
    %226 = vmatpush1.msra.mxu0 0.0
    %227 = vmatprep.subr.mxu0 0.0
    %228 = vmatpush1.msra.mxu0 0.0
    %229 = vmatprep.subr.mxu0 0.0
    %230 = vmatpush1.msra.mxu0 0.0
    %231 = vmatprep.subr.mxu0 0.0
    %232 = vmatpush1.msra.mxu0 0.0
    %233 = vmatprep.subr.mxu0 0.0
    %234 = vmatpush1.msra.mxu0 0.0
    %235 = vmatprep.subr.mxu0 0.0
    %236 = vmatpush1.msra.mxu0 0.0
    %237 = vmatprep.subr.mxu0 0.0
    %238 = vmatpush1.msra.mxu0 0.0
    %239 = vmatprep.subr.mxu0 0.0
    %240 = vmatpush1.msra.mxu0 0.0
    %241 = vmatprep.subr.mxu0 0.0
    %242 = vmatpush1.msra.mxu0 0.0
    %243 = vmatprep.mubr.f32.mxu0 0.0
    %244 = vmatmul.mubr.f32.gmra.mrb[0].mxu0 %v177
    %v245 = vpop.f32.mrb[0].mxu0
    %v246 = vadd.f32 0.0, %v245
    %v247 = vpop.f32.mrb[0].mxu0
    %248 = vdwg.mxu0
    %v249 = vadd.f32 %v133, %v246
    %v250 = vxor.u32 %v249, 2147483648
    %v251 = vmul.f32 %v250, 1.442695
    %v252 = vpow.pop %v251
    %v253 = vadd.f32 %v252, 1.0
    %v254 = vrcp.pop %v253
    %v255 = vmul.f32 1.0, %v254
    %v256 = vtanh.pop %v249
    %v257 = vmul.f32 %v255, 0.0
    %259 = vrot.lane.b32.xlu0 %v256, 32
    %v260 = vpop.permute.xlu0 %259
    %v262 = vmul.f32 %v255, %v260
    %264 = vrot.lane.b32.xlu0 %v262, 32
    %v265 = vpop.permute.xlu0 %264
    %v267 = vadd.f32 %v257, %v265
    %v268 = vtanh.pop %v267
    %270 = vrot.lane.b32.xlu0 %v268, 32
    %v271 = vpop.permute.xlu0 %270
    %v273 = vmul.f32 %v255, %v271
    %275 = vrot.lane.b32.xlu0 %v273, 64
    %v276 = vpop.permute.xlu0 %275
    %278 = vst.msk [vmem:[#allocation2] sm:$0xff] %vm175, %v276
    %v279 = vsel %vm175, %v276, 0
    %281 = vmatprep.subr.mxu0 0.0
    %282 = vmatpush1.msra.mxu0 %v171
    %283 = vmatprep.subr.mxu0 0.0
    %284 = vmatpush1.msra.mxu0 %v172
    %285 = vmatprep.subr.mxu0 0.0
    %286 = vmatpush1.msra.mxu0 %v173
    %287 = vmatprep.subr.mxu0 0.0
    %288 = vmatpush1.msra.mxu0 %v174
    %289 = vmatprep.subr.mxu0 0.0
    %290 = vmatpush1.msra.mxu0 0.0
    %291 = vmatprep.subr.mxu0 0.0
    %292 = vmatpush1.msra.mxu0 0.0
    %293 = vmatprep.subr.mxu0 0.0
    %294 = vmatpush1.msra.mxu0 0.0
    %295 = vmatprep.subr.mxu0 0.0
    %296 = vmatpush1.msra.mxu0 0.0
    %297 = vmatprep.subr.mxu0 0.0
    %298 = vmatpush1.msra.mxu0 0.0
    %299 = vmatprep.subr.mxu0 0.0
    %300 = vmatpush1.msra.mxu0 0.0
    %301 = vmatprep.subr.mxu0 0.0
    %302 = vmatpush1.msra.mxu0 0.0
    %303 = vmatprep.subr.mxu0 0.0
    %304 = vmatpush1.msra.mxu0 0.0
    %305 = vmatprep.subr.mxu0 0.0
    %306 = vmatpush1.msra.mxu0 0.0
    %307 = vmatprep.subr.mxu0 0.0
    %308 = vmatpush1.msra.mxu0 0.0
    %309 = vmatprep.subr.mxu0 0.0
    %310 = vmatpush1.msra.mxu0 0.0
    %311 = vmatprep.subr.mxu0 0.0
    %312 = vmatpush1.msra.mxu0 0.0
    %313 = vmatprep.subr.mxu0 0.0
    %314 = vmatpush1.msra.mxu0 0.0
    %315 = vmatprep.subr.mxu0 0.0
    %316 = vmatpush1.msra.mxu0 0.0
    %317 = vmatprep.subr.mxu0 0.0
    %318 = vmatpush1.msra.mxu0 0.0
    %319 = vmatprep.subr.mxu0 0.0
    %320 = vmatpush1.msra.mxu0 0.0
    %321 = vmatprep.subr.mxu0 0.0
    %322 = vmatpush1.msra.mxu0 0.0
    %323 = vmatprep.subr.mxu0 0.0
    %324 = vmatpush1.msra.mxu0 0.0
    %325 = vmatprep.subr.mxu0 0.0
    %326 = vmatpush1.msra.mxu0 0.0
    %327 = vmatprep.subr.mxu0 0.0
    %328 = vmatpush1.msra.mxu0 0.0
    %329 = vmatprep.subr.mxu0 0.0
    %330 = vmatpush1.msra.mxu0 0.0
    %331 = vmatprep.subr.mxu0 0.0
    %332 = vmatpush1.msra.mxu0 0.0
    %333 = vmatprep.subr.mxu0 0.0
    %334 = vmatpush1.msra.mxu0 0.0
    %335 = vmatprep.subr.mxu0 0.0
    %336 = vmatpush1.msra.mxu0 0.0
    %337 = vmatprep.subr.mxu0 0.0
    %338 = vmatpush1.msra.mxu0 0.0
    %339 = vmatprep.subr.mxu0 0.0
    %340 = vmatpush1.msra.mxu0 0.0
    %341 = vmatprep.subr.mxu0 0.0
    %342 = vmatpush1.msra.mxu0 0.0
    %343 = vmatprep.subr.mxu0 0.0
    %344 = vmatpush1.msra.mxu0 0.0
    %345 = vmatprep.mubr.f32.mxu0 0.0
    %346 = vmatmul.mubr.f32.gmra.mrb[0].mxu0 %v279
    %v347 = vpop.f32.mrb[0].mxu0
    %v348 = vadd.f32 0.0, %v347
    %v349 = vpop.f32.mrb[0].mxu0
    %350 = vdwg.mxu0
    %v351 = vadd.f32 %v138, %v348
    %v352 = vxor.u32 %v351, 2147483648
    %v353 = vmul.f32 %v352, 1.442695
    %v354 = vpow.pop %v353
    %v355 = vadd.f32 %v354, 1.0
    %v356 = vrcp.pop %v355
    %v357 = vmul.f32 1.0, %v356
    %v358 = vtanh.pop %v351
    %v359 = vmul.f32 %v357, %v267
    %361 = vrot.lane.b32.xlu0 %v358, 32
    %v362 = vpop.permute.xlu0 %361
    %v364 = vmul.f32 %v357, %v362
    %366 = vrot.lane.b32.xlu0 %v364, 32
    %v367 = vpop.permute.xlu0 %366
    %v369 = vadd.f32 %v359, %v367
    %v370 = vtanh.pop %v369
    %372 = vrot.lane.b32.xlu0 %v370, 32
    %v373 = vpop.permute.xlu0 %372
    %v375 = vmul.f32 %v357, %v373
    %377 = vrot.lane.b32.xlu0 %v375, 64
    %v378 = vpop.permute.xlu0 %377
    %380 = vst.msk [vmem:[#allocation2 + $0x8] sm:$0xff] %vm175, %v378
    %v381 = vsel %vm175, %v378, 0
    %383 = vmatprep.subr.mxu0 0.0
    %384 = vmatpush1.msra.mxu0 %v171
    %385 = vmatprep.subr.mxu0 0.0
    %386 = vmatpush1.msra.mxu0 %v172
    %387 = vmatprep.subr.mxu0 0.0
    %388 = vmatpush1.msra.mxu0 %v173
    %389 = vmatprep.subr.mxu0 0.0
    %390 = vmatpush1.msra.mxu0 %v174
    %391 = vmatprep.subr.mxu0 0.0
    %392 = vmatpush1.msra.mxu0 0.0
    %393 = vmatprep.subr.mxu0 0.0
    %394 = vmatpush1.msra.mxu0 0.0
    %395 = vmatprep.subr.mxu0 0.0
    %396 = vmatpush1.msra.mxu0 0.0
    %397 = vmatprep.subr.mxu0 0.0
    %398 = vmatpush1.msra.mxu0 0.0
    %399 = vmatprep.subr.mxu0 0.0
    %400 = vmatpush1.msra.mxu0 0.0
    %401 = vmatprep.subr.mxu0 0.0
    %402 = vmatpush1.msra.mxu0 0.0
    %403 = vmatprep.subr.mxu0 0.0
    %404 = vmatpush1.msra.mxu0 0.0
    %405 = vmatprep.subr.mxu0 0.0
    %406 = vmatpush1.msra.mxu0 0.0
    %407 = vmatprep.subr.mxu0 0.0
    %408 = vmatpush1.msra.mxu0 0.0
    %409 = vmatprep.subr.mxu0 0.0
    %410 = vmatpush1.msra.mxu0 0.0
    %411 = vmatprep.subr.mxu0 0.0
    %412 = vmatpush1.msra.mxu0 0.0
    %413 = vmatprep.subr.mxu0 0.0
    %414 = vmatpush1.msra.mxu0 0.0
    %415 = vmatprep.subr.mxu0 0.0
    %416 = vmatpush1.msra.mxu0 0.0
    %417 = vmatprep.subr.mxu0 0.0
    %418 = vmatpush1.msra.mxu0 0.0
    %419 = vmatprep.subr.mxu0 0.0
    %420 = vmatpush1.msra.mxu0 0.0
    %421 = vmatprep.subr.mxu0 0.0
    %422 = vmatpush1.msra.mxu0 0.0
    %423 = vmatprep.subr.mxu0 0.0
    %424 = vmatpush1.msra.mxu0 0.0
    %425 = vmatprep.subr.mxu0 0.0
    %426 = vmatpush1.msra.mxu0 0.0
    %427 = vmatprep.subr.mxu0 0.0
    %428 = vmatpush1.msra.mxu0 0.0
    %429 = vmatprep.subr.mxu0 0.0
    %430 = vmatpush1.msra.mxu0 0.0
    %431 = vmatprep.subr.mxu0 0.0
    %432 = vmatpush1.msra.mxu0 0.0
    %433 = vmatprep.subr.mxu0 0.0
    %434 = vmatpush1.msra.mxu0 0.0
    %435 = vmatprep.subr.mxu0 0.0
    %436 = vmatpush1.msra.mxu0 0.0
    %437 = vmatprep.subr.mxu0 0.0
    %438 = vmatpush1.msra.mxu0 0.0
    %439 = vmatprep.subr.mxu0 0.0
    %440 = vmatpush1.msra.mxu0 0.0
    %441 = vmatprep.subr.mxu0 0.0
    %442 = vmatpush1.msra.mxu0 0.0
    %443 = vmatprep.subr.mxu0 0.0
    %444 = vmatpush1.msra.mxu0 0.0
    %445 = vmatprep.subr.mxu0 0.0
    %446 = vmatpush1.msra.mxu0 0.0
    %447 = vmatprep.mubr.f32.mxu0 0.0
    %448 = vmatmul.mubr.f32.gmra.mrb[0].mxu0 %v381
    %v449 = vpop.f32.mrb[0].mxu0
    %v450 = vadd.f32 0.0, %v449
    %v451 = vpop.f32.mrb[0].mxu0
    %452 = vdwg.mxu0
    %v453 = vadd.f32 %v143, %v450
    %v454 = vxor.u32 %v453, 2147483648
    %v455 = vmul.f32 %v454, 1.442695
    %v456 = vpow.pop %v455
    %v457 = vadd.f32 %v456, 1.0
    %v458 = vrcp.pop %v457
    %v459 = vmul.f32 1.0, %v458
    %v460 = vtanh.pop %v453
    %v461 = vmul.f32 %v459, %v369
    %463 = vrot.lane.b32.xlu0 %v460, 32
    %v464 = vpop.permute.xlu0 %463
    %v466 = vmul.f32 %v459, %v464
    %468 = vrot.lane.b32.xlu0 %v466, 32
    %v469 = vpop.permute.xlu0 %468
    %v471 = vadd.f32 %v461, %v469
    %v472 = vtanh.pop %v471
    %474 = vrot.lane.b32.xlu0 %v472, 32
    %v475 = vpop.permute.xlu0 %474
    %v477 = vmul.f32 %v459, %v475
    %479 = vrot.lane.b32.xlu0 %v477, 64
    %v480 = vpop.permute.xlu0 %479
    %482 = vst.msk [vmem:[#allocation2 + $0x10] sm:$0xff] %vm175, %v480
    %v483 = vsel %vm175, %v480, 0
    %485 = vmatprep.subr.mxu0 0.0
    %486 = vmatpush1.msra.mxu0 %v171
    %487 = vmatprep.subr.mxu0 0.0
    %488 = vmatpush1.msra.mxu0 %v172
    %489 = vmatprep.subr.mxu0 0.0
    %490 = vmatpush1.msra.mxu0 %v173
    %491 = vmatprep.subr.mxu0 0.0
    %492 = vmatpush1.msra.mxu0 %v174
    %493 = vmatprep.subr.mxu0 0.0
    %494 = vmatpush1.msra.mxu0 0.0
    %495 = vmatprep.subr.mxu0 0.0
    %496 = vmatpush1.msra.mxu0 0.0
    %497 = vmatprep.subr.mxu0 0.0
    %498 = vmatpush1.msra.mxu0 0.0
    %499 = vmatprep.subr.mxu0 0.0
    %500 = vmatpush1.msra.mxu0 0.0
    %501 = vmatprep.subr.mxu0 0.0
    %502 = vmatpush1.msra.mxu0 0.0
    %503 = vmatprep.subr.mxu0 0.0
    %504 = vmatpush1.msra.mxu0 0.0
    %505 = vmatprep.subr.mxu0 0.0
    %506 = vmatpush1.msra.mxu0 0.0
    %507 = vmatprep.subr.mxu0 0.0
    %508 = vmatpush1.msra.mxu0 0.0
    %509 = vmatprep.subr.mxu0 0.0
    %510 = vmatpush1.msra.mxu0 0.0
    %511 = vmatprep.subr.mxu0 0.0
    %512 = vmatpush1.msra.mxu0 0.0
    %513 = vmatprep.subr.mxu0 0.0
    %514 = vmatpush1.msra.mxu0 0.0
    %515 = vmatprep.subr.mxu0 0.0
    %516 = vmatpush1.msra.mxu0 0.0
    %517 = vmatprep.subr.mxu0 0.0
    %518 = vmatpush1.msra.mxu0 0.0
    %519 = vmatprep.subr.mxu0 0.0
    %520 = vmatpush1.msra.mxu0 0.0
    %521 = vmatprep.subr.mxu0 0.0
    %522 = vmatpush1.msra.mxu0 0.0
    %523 = vmatprep.subr.mxu0 0.0
    %524 = vmatpush1.msra.mxu0 0.0
    %525 = vmatprep.subr.mxu0 0.0
    %526 = vmatpush1.msra.mxu0 0.0
    %527 = vmatprep.subr.mxu0 0.0
    %528 = vmatpush1.msra.mxu0 0.0
    %529 = vmatprep.subr.mxu0 0.0
    %530 = vmatpush1.msra.mxu0 0.0
    %531 = vmatprep.subr.mxu0 0.0
    %532 = vmatpush1.msra.mxu0 0.0
    %533 = vmatprep.subr.mxu0 0.0
    %534 = vmatpush1.msra.mxu0 0.0
    %535 = vmatprep.subr.mxu0 0.0
    %536 = vmatpush1.msra.mxu0 0.0
    %537 = vmatprep.subr.mxu0 0.0
    %538 = vmatpush1.msra.mxu0 0.0
    %539 = vmatprep.subr.mxu0 0.0
    %540 = vmatpush1.msra.mxu0 0.0
    %541 = vmatprep.subr.mxu0 0.0
    %542 = vmatpush1.msra.mxu0 0.0
    %543 = vmatprep.subr.mxu0 0.0
    %544 = vmatpush1.msra.mxu0 0.0
    %545 = vmatprep.subr.mxu0 0.0
    %546 = vmatpush1.msra.mxu0 0.0
    %547 = vmatprep.subr.mxu0 0.0
    %548 = vmatpush1.msra.mxu0 0.0
    %549 = vmatprep.mubr.f32.mxu0 0.0
    %550 = vmatmul.mubr.f32.gmra.mrb[0].mxu0 %v483
    %v551 = vpop.f32.mrb[0].mxu0
    %v552 = vadd.f32 0.0, %v551
    %v553 = vpop.f32.mrb[0].mxu0
    %554 = vdwg.mxu0
    %v555 = vadd.f32 %v148, %v552
    %v556 = vxor.u32 %v555, 2147483648
    %v557 = vmul.f32 %v556, 1.442695
    %v558 = vpow.pop %v557
    %v559 = vadd.f32 %v558, 1.0
    %v560 = vrcp.pop %v559
    %v561 = vmul.f32 1.0, %v560
    %v562 = vtanh.pop %v555
    %v563 = vmul.f32 %v561, %v471
    %565 = vrot.lane.b32.xlu0 %v562, 32
    %v566 = vpop.permute.xlu0 %565
    %v568 = vmul.f32 %v561, %v566
    %570 = vrot.lane.b32.xlu0 %v568, 32
    %v571 = vpop.permute.xlu0 %570
    %v573 = vadd.f32 %v563, %v571
    %v574 = vtanh.pop %v573
    %576 = vrot.lane.b32.xlu0 %v574, 32
    %v577 = vpop.permute.xlu0 %576
    %v579 = vmul.f32 %v561, %v577
    %581 = vrot.lane.b32.xlu0 %v579, 64
    %v582 = vpop.permute.xlu0 %581
    %584 = vst.msk [vmem:[#allocation2 + $0x18] sm:$0xff] %vm175, %v582
    %v585 = vsel %vm175, %v582, 0
    %587 = vmatprep.subr.mxu0 0.0
    %588 = vmatpush1.msra.mxu0 %v171
    %589 = vmatprep.subr.mxu0 0.0
    %590 = vmatpush1.msra.mxu0 %v172
    %591 = vmatprep.subr.mxu0 0.0
    %592 = vmatpush1.msra.mxu0 %v173
    %593 = vmatprep.subr.mxu0 0.0
    %594 = vmatpush1.msra.mxu0 %v174
    %595 = vmatprep.subr.mxu0 0.0
    %596 = vmatpush1.msra.mxu0 0.0
    %597 = vmatprep.subr.mxu0 0.0
    %598 = vmatpush1.msra.mxu0 0.0
    %599 = vmatprep.subr.mxu0 0.0
    %600 = vmatpush1.msra.mxu0 0.0
    %601 = vmatprep.subr.mxu0 0.0
    %602 = vmatpush1.msra.mxu0 0.0
    %603 = vmatprep.subr.mxu0 0.0
    %604 = vmatpush1.msra.mxu0 0.0
    %605 = vmatprep.subr.mxu0 0.0
    %606 = vmatpush1.msra.mxu0 0.0
    %607 = vmatprep.subr.mxu0 0.0
    %608 = vmatpush1.msra.mxu0 0.0
    %609 = vmatprep.subr.mxu0 0.0
    %610 = vmatpush1.msra.mxu0 0.0
    %611 = vmatprep.subr.mxu0 0.0
    %612 = vmatpush1.msra.mxu0 0.0
    %613 = vmatprep.subr.mxu0 0.0
    %614 = vmatpush1.msra.mxu0 0.0
    %615 = vmatprep.subr.mxu0 0.0
    %616 = vmatpush1.msra.mxu0 0.0
    %617 = vmatprep.subr.mxu0 0.0
    %618 = vmatpush1.msra.mxu0 0.0
    %619 = vmatprep.subr.mxu0 0.0
    %620 = vmatpush1.msra.mxu0 0.0
    %621 = vmatprep.subr.mxu0 0.0
    %622 = vmatpush1.msra.mxu0 0.0
    %623 = vmatprep.subr.mxu0 0.0
    %624 = vmatpush1.msra.mxu0 0.0
    %625 = vmatprep.subr.mxu0 0.0
    %626 = vmatpush1.msra.mxu0 0.0
    %627 = vmatprep.subr.mxu0 0.0
    %628 = vmatpush1.msra.mxu0 0.0
    %629 = vmatprep.subr.mxu0 0.0
    %630 = vmatpush1.msra.mxu0 0.0
    %631 = vmatprep.subr.mxu0 0.0
    %632 = vmatpush1.msra.mxu0 0.0
    %633 = vmatprep.subr.mxu0 0.0
    %634 = vmatpush1.msra.mxu0 0.0
    %635 = vmatprep.subr.mxu0 0.0
    %636 = vmatpush1.msra.mxu0 0.0
    %637 = vmatprep.subr.mxu0 0.0
    %638 = vmatpush1.msra.mxu0 0.0
    %639 = vmatprep.subr.mxu0 0.0
    %640 = vmatpush1.msra.mxu0 0.0
    %641 = vmatprep.subr.mxu0 0.0
    %642 = vmatpush1.msra.mxu0 0.0
    %643 = vmatprep.subr.mxu0 0.0
    %644 = vmatpush1.msra.mxu0 0.0
    %645 = vmatprep.subr.mxu0 0.0
    %646 = vmatpush1.msra.mxu0 0.0
    %647 = vmatprep.subr.mxu0 0.0
    %648 = vmatpush1.msra.mxu0 0.0
    %649 = vmatprep.subr.mxu0 0.0
    %650 = vmatpush1.msra.mxu0 0.0
    %651 = vmatprep.mubr.f32.mxu0 0.0
    %652 = vmatmul.mubr.f32.gmra.mrb[0].mxu0 %v585
    %v653 = vpop.f32.mrb[0].mxu0
    %v654 = vadd.f32 0.0, %v653
    %v655 = vpop.f32.mrb[0].mxu0
    %656 = vdwg.mxu0
    %v657 = vadd.f32 %v153, %v654
    %v658 = vxor.u32 %v657, 2147483648
    %v659 = vmul.f32 %v658, 1.442695
    %v660 = vpow.pop %v659
    %v661 = vadd.f32 %v660, 1.0
    %v662 = vrcp.pop %v661
    %v663 = vmul.f32 1.0, %v662
    %v664 = vtanh.pop %v657
    %v665 = vmul.f32 %v663, %v573
    %667 = vrot.lane.b32.xlu0 %v664, 32
    %v668 = vpop.permute.xlu0 %667
    %v670 = vmul.f32 %v663, %v668
    %672 = vrot.lane.b32.xlu0 %v670, 32
    %v673 = vpop.permute.xlu0 %672
    %v675 = vadd.f32 %v665, %v673
    %v676 = vtanh.pop %v675
    %678 = vrot.lane.b32.xlu0 %v676, 32
    %v679 = vpop.permute.xlu0 %678
    %v681 = vmul.f32 %v663, %v679
    %683 = vrot.lane.b32.xlu0 %v681, 64
    %v684 = vpop.permute.xlu0 %683
    %686 = vst.msk [vmem:[#allocation2 + $0x20] sm:$0xff] %vm175, %v684
    %v687 = vsel %vm175, %v684, 0
    %689 = vmatprep.subr.mxu0 0.0
    %690 = vmatpush1.msra.mxu0 %v171
    %691 = vmatprep.subr.mxu0 0.0
    %692 = vmatpush1.msra.mxu0 %v172
    %693 = vmatprep.subr.mxu0 0.0
    %694 = vmatpush1.msra.mxu0 %v173
    %695 = vmatprep.subr.mxu0 0.0
    %696 = vmatpush1.msra.mxu0 %v174
    %697 = vmatprep.subr.mxu0 0.0
    %698 = vmatpush1.msra.mxu0 0.0
    %699 = vmatprep.subr.mxu0 0.0
    %700 = vmatpush1.msra.mxu0 0.0
    %701 = vmatprep.subr.mxu0 0.0
    %702 = vmatpush1.msra.mxu0 0.0
    %703 = vmatprep.subr.mxu0 0.0
    %704 = vmatpush1.msra.mxu0 0.0
    %705 = vmatprep.subr.mxu0 0.0
    %706 = vmatpush1.msra.mxu0 0.0
    %707 = vmatprep.subr.mxu0 0.0
    %708 = vmatpush1.msra.mxu0 0.0
    %709 = vmatprep.subr.mxu0 0.0
    %710 = vmatpush1.msra.mxu0 0.0
    %711 = vmatprep.subr.mxu0 0.0
    %712 = vmatpush1.msra.mxu0 0.0
    %713 = vmatprep.subr.mxu0 0.0
    %714 = vmatpush1.msra.mxu0 0.0
    %715 = vmatprep.subr.mxu0 0.0
    %716 = vmatpush1.msra.mxu0 0.0
    %717 = vmatprep.subr.mxu0 0.0
    %718 = vmatpush1.msra.mxu0 0.0
    %719 = vmatprep.subr.mxu0 0.0
    %720 = vmatpush1.msra.mxu0 0.0
    %721 = vmatprep.subr.mxu0 0.0
    %722 = vmatpush1.msra.mxu0 0.0
    %723 = vmatprep.subr.mxu0 0.0
    %724 = vmatpush1.msra.mxu0 0.0
    %725 = vmatprep.subr.mxu0 0.0
    %726 = vmatpush1.msra.mxu0 0.0
    %727 = vmatprep.subr.mxu0 0.0
    %728 = vmatpush1.msra.mxu0 0.0
    %729 = vmatprep.subr.mxu0 0.0
    %730 = vmatpush1.msra.mxu0 0.0
    %731 = vmatprep.subr.mxu0 0.0
    %732 = vmatpush1.msra.mxu0 0.0
    %733 = vmatprep.subr.mxu0 0.0
    %734 = vmatpush1.msra.mxu0 0.0
    %735 = vmatprep.subr.mxu0 0.0
    %736 = vmatpush1.msra.mxu0 0.0
    %737 = vmatprep.subr.mxu0 0.0
    %738 = vmatpush1.msra.mxu0 0.0
    %739 = vmatprep.subr.mxu0 0.0
    %740 = vmatpush1.msra.mxu0 0.0
    %741 = vmatprep.subr.mxu0 0.0
    %742 = vmatpush1.msra.mxu0 0.0
    %743 = vmatprep.subr.mxu0 0.0
    %744 = vmatpush1.msra.mxu0 0.0
    %745 = vmatprep.subr.mxu0 0.0
    %746 = vmatpush1.msra.mxu0 0.0
    %747 = vmatprep.subr.mxu0 0.0
    %748 = vmatpush1.msra.mxu0 0.0
    %749 = vmatprep.subr.mxu0 0.0
    %750 = vmatpush1.msra.mxu0 0.0
    %751 = vmatprep.subr.mxu0 0.0
    %752 = vmatpush1.msra.mxu0 0.0
    %753 = vmatprep.mubr.f32.mxu0 0.0
    %754 = vmatmul.mubr.f32.gmra.mrb[0].mxu0 %v687
    %v755 = vpop.f32.mrb[0].mxu0
    %v756 = vadd.f32 0.0, %v755
    %v757 = vpop.f32.mrb[0].mxu0
    %758 = vdwg.mxu0
    %v759 = vadd.f32 %v158, %v756
    %v760 = vxor.u32 %v759, 2147483648
    %v761 = vmul.f32 %v760, 1.442695
    %v762 = vpow.pop %v761
    %v763 = vadd.f32 %v762, 1.0
    %v764 = vrcp.pop %v763
    %v765 = vmul.f32 1.0, %v764
    %v766 = vtanh.pop %v759
    %v767 = vmul.f32 %v765, %v675
    %769 = vrot.lane.b32.xlu0 %v766, 32
    %v770 = vpop.permute.xlu0 %769
    %v772 = vmul.f32 %v765, %v770
    %774 = vrot.lane.b32.xlu0 %v772, 32
    %v775 = vpop.permute.xlu0 %774
    %v777 = vadd.f32 %v767, %v775
    %v778 = vtanh.pop %v777
    %780 = vrot.lane.b32.xlu0 %v778, 32
    %v781 = vpop.permute.xlu0 %780
    %v783 = vmul.f32 %v765, %v781
    %785 = vrot.lane.b32.xlu0 %v783, 64
    %v786 = vpop.permute.xlu0 %785
    %788 = vst.msk [vmem:[#allocation2 + $0x28] sm:$0xff] %vm175, %v786
    %v789 = vsel %vm175, %v786, 0
    %791 = vmatprep.subr.mxu0 0.0
    %792 = vmatpush1.msra.mxu0 %v171
    %793 = vmatprep.subr.mxu0 0.0
    %794 = vmatpush1.msra.mxu0 %v172
    %795 = vmatprep.subr.mxu0 0.0
    %796 = vmatpush1.msra.mxu0 %v173
    %797 = vmatprep.subr.mxu0 0.0
    %798 = vmatpush1.msra.mxu0 %v174
    %799 = vmatprep.subr.mxu0 0.0
    %800 = vmatpush1.msra.mxu0 0.0
    %801 = vmatprep.subr.mxu0 0.0
    %802 = vmatpush1.msra.mxu0 0.0
    %803 = vmatprep.subr.mxu0 0.0
    %804 = vmatpush1.msra.mxu0 0.0
    %805 = vmatprep.subr.mxu0 0.0
    %806 = vmatpush1.msra.mxu0 0.0
    %807 = vmatprep.subr.mxu0 0.0
    %808 = vmatpush1.msra.mxu0 0.0
    %809 = vmatprep.subr.mxu0 0.0
    %810 = vmatpush1.msra.mxu0 0.0
    %811 = vmatprep.subr.mxu0 0.0
    %812 = vmatpush1.msra.mxu0 0.0
    %813 = vmatprep.subr.mxu0 0.0
    %814 = vmatpush1.msra.mxu0 0.0
    %815 = vmatprep.subr.mxu0 0.0
    %816 = vmatpush1.msra.mxu0 0.0
    %817 = vmatprep.subr.mxu0 0.0
    %818 = vmatpush1.msra.mxu0 0.0
    %819 = vmatprep.subr.mxu0 0.0
    %820 = vmatpush1.msra.mxu0 0.0
    %821 = vmatprep.subr.mxu0 0.0
    %822 = vmatpush1.msra.mxu0 0.0
    %823 = vmatprep.subr.mxu0 0.0
    %824 = vmatpush1.msra.mxu0 0.0
    %825 = vmatprep.subr.mxu0 0.0
    %826 = vmatpush1.msra.mxu0 0.0
    %827 = vmatprep.subr.mxu0 0.0
    %828 = vmatpush1.msra.mxu0 0.0
    %829 = vmatprep.subr.mxu0 0.0
    %830 = vmatpush1.msra.mxu0 0.0
    %831 = vmatprep.subr.mxu0 0.0
    %832 = vmatpush1.msra.mxu0 0.0
    %833 = vmatprep.subr.mxu0 0.0
    %834 = vmatpush1.msra.mxu0 0.0
    %835 = vmatprep.subr.mxu0 0.0
    %836 = vmatpush1.msra.mxu0 0.0
    %837 = vmatprep.subr.mxu0 0.0
    %838 = vmatpush1.msra.mxu0 0.0
    %839 = vmatprep.subr.mxu0 0.0
    %840 = vmatpush1.msra.mxu0 0.0
    %841 = vmatprep.subr.mxu0 0.0
    %842 = vmatpush1.msra.mxu0 0.0
    %843 = vmatprep.subr.mxu0 0.0
    %844 = vmatpush1.msra.mxu0 0.0
    %845 = vmatprep.subr.mxu0 0.0
    %846 = vmatpush1.msra.mxu0 0.0
    %847 = vmatprep.subr.mxu0 0.0
    %848 = vmatpush1.msra.mxu0 0.0
    %849 = vmatprep.subr.mxu0 0.0
    %850 = vmatpush1.msra.mxu0 0.0
    %851 = vmatprep.subr.mxu0 0.0
    %852 = vmatpush1.msra.mxu0 0.0
    %853 = vmatprep.subr.mxu0 0.0
    %854 = vmatpush1.msra.mxu0 0.0
    %855 = vmatprep.mubr.f32.mxu0 0.0
    %856 = vmatmul.mubr.f32.gmra.mrb[0].mxu0 %v789
    %v857 = vpop.f32.mrb[0].mxu0
    %v858 = vadd.f32 0.0, %v857
    %v859 = vpop.f32.mrb[0].mxu0
    %860 = vdwg.mxu0
    %v861 = vadd.f32 %v163, %v858
    %v862 = vxor.u32 %v861, 2147483648
    %v863 = vmul.f32 %v862, 1.442695
    %v864 = vpow.pop %v863
    %v865 = vadd.f32 %v864, 1.0
    %v866 = vrcp.pop %v865
    %v867 = vmul.f32 1.0, %v866
    %v868 = vtanh.pop %v861
    %v869 = vmul.f32 %v867, %v777
    %871 = vrot.lane.b32.xlu0 %v868, 32
    %v872 = vpop.permute.xlu0 %871
    %v874 = vmul.f32 %v867, %v872
    %876 = vrot.lane.b32.xlu0 %v874, 32
    %v877 = vpop.permute.xlu0 %876
    %v879 = vadd.f32 %v869, %v877
    %v880 = vtanh.pop %v879
    %882 = vrot.lane.b32.xlu0 %v880, 32
    %v883 = vpop.permute.xlu0 %882
    %v885 = vmul.f32 %v867, %v883
    %887 = vrot.lane.b32.xlu0 %v885, 64
    %v888 = vpop.permute.xlu0 %887
    %890 = vst.msk [vmem:[#allocation2 + $0x30] sm:$0xff] %vm175, %v888
    %v891 = vsel %vm175, %v888, 0
    %893 = vmatprep.subr.mxu0 0.0
    %894 = vmatpush1.msra.mxu0 %v171
    %895 = vmatprep.subr.mxu0 0.0
    %896 = vmatpush1.msra.mxu0 %v172
    %897 = vmatprep.subr.mxu0 0.0
    %898 = vmatpush1.msra.mxu0 %v173
    %899 = vmatprep.subr.mxu0 0.0
    %900 = vmatpush1.msra.mxu0 %v174
    %901 = vmatprep.subr.mxu0 0.0
    %902 = vmatpush1.msra.mxu0 0.0
    %903 = vmatprep.subr.mxu0 0.0
    %904 = vmatpush1.msra.mxu0 0.0
    %905 = vmatprep.subr.mxu0 0.0
    %906 = vmatpush1.msra.mxu0 0.0
    %907 = vmatprep.subr.mxu0 0.0
    %908 = vmatpush1.msra.mxu0 0.0
    %909 = vmatprep.subr.mxu0 0.0
    %910 = vmatpush1.msra.mxu0 0.0
    %911 = vmatprep.subr.mxu0 0.0
    %912 = vmatpush1.msra.mxu0 0.0
    %913 = vmatprep.subr.mxu0 0.0
    %914 = vmatpush1.msra.mxu0 0.0
    %915 = vmatprep.subr.mxu0 0.0
    %916 = vmatpush1.msra.mxu0 0.0
    %917 = vmatprep.subr.mxu0 0.0
    %918 = vmatpush1.msra.mxu0 0.0
    %919 = vmatprep.subr.mxu0 0.0
    %920 = vmatpush1.msra.mxu0 0.0
    %921 = vmatprep.subr.mxu0 0.0
    %922 = vmatpush1.msra.mxu0 0.0
    %923 = vmatprep.subr.mxu0 0.0
    %924 = vmatpush1.msra.mxu0 0.0
    %925 = vmatprep.subr.mxu0 0.0
    %926 = vmatpush1.msra.mxu0 0.0
    %927 = vmatprep.subr.mxu0 0.0
    %928 = vmatpush1.msra.mxu0 0.0
    %929 = vmatprep.subr.mxu0 0.0
    %930 = vmatpush1.msra.mxu0 0.0
    %931 = vmatprep.subr.mxu0 0.0
    %932 = vmatpush1.msra.mxu0 0.0
    %933 = vmatprep.subr.mxu0 0.0
    %934 = vmatpush1.msra.mxu0 0.0
    %935 = vmatprep.subr.mxu0 0.0
    %936 = vmatpush1.msra.mxu0 0.0
    %937 = vmatprep.subr.mxu0 0.0
    %938 = vmatpush1.msra.mxu0 0.0
    %939 = vmatprep.subr.mxu0 0.0
    %940 = vmatpush1.msra.mxu0 0.0
    %941 = vmatprep.subr.mxu0 0.0
    %942 = vmatpush1.msra.mxu0 0.0
    %943 = vmatprep.subr.mxu0 0.0
    %944 = vmatpush1.msra.mxu0 0.0
    %945 = vmatprep.subr.mxu0 0.0
    %946 = vmatpush1.msra.mxu0 0.0
    %947 = vmatprep.subr.mxu0 0.0
    %948 = vmatpush1.msra.mxu0 0.0
    %949 = vmatprep.subr.mxu0 0.0
    %950 = vmatpush1.msra.mxu0 0.0
    %951 = vmatprep.subr.mxu0 0.0
    %952 = vmatpush1.msra.mxu0 0.0
    %953 = vmatprep.subr.mxu0 0.0
    %954 = vmatpush1.msra.mxu0 0.0
    %955 = vmatprep.subr.mxu0 0.0
    %956 = vmatpush1.msra.mxu0 0.0
    %957 = vmatprep.mubr.f32.mxu0 0.0
    %958 = vmatmul.mubr.f32.gmra.mrb[0].mxu0 %v891
    %v959 = vpop.f32.mrb[0].mxu0
    %v960 = vadd.f32 0.0, %v959
    %v961 = vpop.f32.mrb[0].mxu0
    %962 = vdwg.mxu0
    %v963 = vadd.f32 %v168, %v960
    %v964 = vxor.u32 %v963, 2147483648
    %v965 = vmul.f32 %v964, 1.442695
    %v966 = vpow.pop %v965
    %v967 = vadd.f32 %v966, 1.0
    %v968 = vrcp.pop %v967
    %v969 = vmul.f32 1.0, %v968
    %v970 = vtanh.pop %v963
    %v971 = vmul.f32 %v969, %v879
    %973 = vrot.lane.b32.xlu0 %v970, 32
    %v974 = vpop.permute.xlu0 %973
    %v976 = vmul.f32 %v969, %v974
    %978 = vrot.lane.b32.xlu0 %v976, 32
    %v979 = vpop.permute.xlu0 %978
    %v981 = vadd.f32 %v971, %v979
    %v982 = vtanh.pop %v981
    %984 = vrot.lane.b32.xlu0 %v982, 32
    %v985 = vpop.permute.xlu0 %984
    %v987 = vmul.f32 %v969, %v985
    %989 = vrot.lane.b32.xlu0 %v987, 64
    %v990 = vpop.permute.xlu0 %989
    %992 = vst.msk [vmem:[#allocation2 + $0x38] sm:$0xff] %vm175, %v990
    %v993 = vld [vmem:[#allocation2] sm:$0xff]
    %v994 = vld [vmem:[#allocation2 + $0x8] sm:$0xff]
    %v995 = vld [vmem:[#allocation2 + $0x10] sm:$0xff]
    %v996 = vld [vmem:[#allocation2 + $0x18] sm:$0xff]
    %v997 = vld [vmem:[#allocation2 + $0x20] sm:$0xff]
    %v998 = vld [vmem:[#allocation2 + $0x28] sm:$0xff]
    %v999 = vld [vmem:[#allocation2 + $0x30] sm:$0xff]
    %v1000 = vld [vmem:[#allocation2 + $0x38] sm:$0xff]
    %v1001 = vld [vmem:[%s4] sm:$0xff]
    %v1002 = vld [vmem:[%s4 + $0x8] sm:$0xff]
    %v1003 = vld [vmem:[%s4 + $0x10] sm:$0xff]
    %v1004 = vld [vmem:[%s4 + $0x18] sm:$0xff]
    %v1005 = vld [vmem:[%s5] sm:$0x1]
    %v1007 = vlaneseq
    %v1008 = vshrl.u32 %v1007, 7
    %v1009 = vsub.s32 0, %v1008
    %v1010 = vrot.slane %v1005, %v1009
    %v1013 = vsel %vm175, %v993, 0
    %v1016 = vsel %vm175, %v994, 0
    %v1019 = vsel %vm175, %v995, 0
    %v1022 = vsel %vm175, %v996, 0
    %v1025 = vsel %vm175, %v997, 0
    %v1028 = vsel %vm175, %v998, 0
    %v1031 = vsel %vm175, %v999, 0
    %v1034 = vsel %vm175, %v1000, 0
    %1036 = vmatprep.subr.mxu0 0.0
    %1037 = vmatpush1.msra.mxu0 %v1001
    %1038 = vmatprep.subr.mxu0 0.0
    %1039 = vmatpush1.msra.mxu0 %v1002
    %1040 = vmatprep.subr.mxu0 0.0
    %1041 = vmatpush1.msra.mxu0 %v1003
    %1042 = vmatprep.subr.mxu0 0.0
    %1043 = vmatpush1.msra.mxu0 %v1004
    %1044 = vmatprep.subr.mxu0 0.0
    %1045 = vmatpush1.msra.mxu0 0.0
    %1046 = vmatprep.subr.mxu0 0.0
    %1047 = vmatpush1.msra.mxu0 0.0
    %1048 = vmatprep.subr.mxu0 0.0
    %1049 = vmatpush1.msra.mxu0 0.0
    %1050 = vmatprep.subr.mxu0 0.0
    %1051 = vmatpush1.msra.mxu0 0.0
    %1052 = vmatprep.subr.mxu0 0.0
    %1053 = vmatpush1.msra.mxu0 0.0
    %1054 = vmatprep.subr.mxu0 0.0
    %1055 = vmatpush1.msra.mxu0 0.0
    %1056 = vmatprep.subr.mxu0 0.0
    %1057 = vmatpush1.msra.mxu0 0.0
    %1058 = vmatprep.subr.mxu0 0.0
    %1059 = vmatpush1.msra.mxu0 0.0
    %1060 = vmatprep.subr.mxu0 0.0
    %1061 = vmatpush1.msra.mxu0 0.0
    %1062 = vmatprep.subr.mxu0 0.0
    %1063 = vmatpush1.msra.mxu0 0.0
    %1064 = vmatprep.subr.mxu0 0.0
    %1065 = vmatpush1.msra.mxu0 0.0
    %1066 = vmatprep.subr.mxu0 0.0
    %1067 = vmatpush1.msra.mxu0 0.0
    %1068 = vmatprep.subr.mxu0 0.0
    %1069 = vmatpush1.msra.mxu0 0.0
    %1070 = vmatprep.subr.mxu0 0.0
    %1071 = vmatpush1.msra.mxu0 0.0
    %1072 = vmatprep.subr.mxu0 0.0
    %1073 = vmatpush1.msra.mxu0 0.0
    %1074 = vmatprep.subr.mxu0 0.0
    %1075 = vmatpush1.msra.mxu0 0.0
    %1076 = vmatprep.subr.mxu0 0.0
    %1077 = vmatpush1.msra.mxu0 0.0
    %1078 = vmatprep.subr.mxu0 0.0
    %1079 = vmatpush1.msra.mxu0 0.0
    %1080 = vmatprep.subr.mxu0 0.0
    %1081 = vmatpush1.msra.mxu0 0.0
    %1082 = vmatprep.subr.mxu0 0.0
    %1083 = vmatpush1.msra.mxu0 0.0
    %1084 = vmatprep.subr.mxu0 0.0
    %1085 = vmatpush1.msra.mxu0 0.0
    %1086 = vmatprep.subr.mxu0 0.0
    %1087 = vmatpush1.msra.mxu0 0.0
    %1088 = vmatprep.subr.mxu0 0.0
    %1089 = vmatpush1.msra.mxu0 0.0
    %1090 = vmatprep.subr.mxu0 0.0
    %1091 = vmatpush1.msra.mxu0 0.0
    %1092 = vmatprep.subr.mxu0 0.0
    %1093 = vmatpush1.msra.mxu0 0.0
    %1094 = vmatprep.subr.mxu0 0.0
    %1095 = vmatpush1.msra.mxu0 0.0
    %1096 = vmatprep.subr.mxu0 0.0
    %1097 = vmatpush1.msra.mxu0 0.0
    %1098 = vmatprep.subr.mxu0 0.0
    %1099 = vmatpush1.msra.mxu0 0.0
    %1100 = vmatprep.mubr.f32.mxu0 0.0
    %1101 = vmatmul.mubr.f32.gmra.mrb[0].mxu0 %v1013
    %v1102 = vpop.f32.mrb[0].mxu0
    %v1103 = vadd.f32 %v1010, %v1102
    %v1104 = vpop.f32.mrb[0].mxu0
    %1105 = vmatprep.mubr.f32.mxu0 0.0
    %1106 = vmatmul.mubr.f32.gmra.mrb[0].mxu0 %v1016
    %v1107 = vpop.f32.mrb[0].mxu0
    %v1108 = vadd.f32 %v1010, %v1107
    %v1109 = vpop.f32.mrb[0].mxu0
    %1110 = vmatprep.mubr.f32.mxu0 0.0
    %1111 = vmatmul.mubr.f32.gmra.mrb[0].mxu0 %v1019
    %v1112 = vpop.f32.mrb[0].mxu0
    %v1113 = vadd.f32 %v1010, %v1112
    %v1114 = vpop.f32.mrb[0].mxu0
    %1115 = vmatprep.mubr.f32.mxu0 0.0
    %1116 = vmatmul.mubr.f32.gmra.mrb[0].mxu0 %v1022
    %v1117 = vpop.f32.mrb[0].mxu0
    %v1118 = vadd.f32 %v1010, %v1117
    %v1119 = vpop.f32.mrb[0].mxu0
    %1120 = vmatprep.mubr.f32.mxu0 0.0
    %1121 = vmatmul.mubr.f32.gmra.mrb[0].mxu0 %v1025
    %v1122 = vpop.f32.mrb[0].mxu0
    %v1123 = vadd.f32 %v1010, %v1122
    %v1124 = vpop.f32.mrb[0].mxu0
    %1125 = vmatprep.mubr.f32.mxu0 0.0
    %1126 = vmatmul.mubr.f32.gmra.mrb[0].mxu0 %v1028
    %v1127 = vpop.f32.mrb[0].mxu0
    %v1128 = vadd.f32 %v1010, %v1127
    %v1129 = vpop.f32.mrb[0].mxu0
    %1130 = vmatprep.mubr.f32.mxu0 0.0
    %1131 = vmatmul.mubr.f32.gmra.mrb[0].mxu0 %v1031
    %v1132 = vpop.f32.mrb[0].mxu0
    %v1133 = vadd.f32 %v1010, %v1132
    %v1134 = vpop.f32.mrb[0].mxu0
    %1135 = vmatprep.mubr.f32.mxu0 0.0
    %1136 = vmatmul.mubr.f32.gmra.mrb[0].mxu0 %v1034
    %v1137 = vpop.f32.mrb[0].mxu0
    %v1138 = vadd.f32 %v1010, %v1137
    %v1139 = vpop.f32.mrb[0].mxu0
    %1140 = vdwg.mxu0
    %1141 = vst [vmem:[#allocation3] sm:$0xff] %v1103
    %1142 = vst [vmem:[#allocation3 + $0x8] sm:$0xff] %v1108
    %1143 = vst [vmem:[#allocation3 + $0x10] sm:$0xff] %v1113
    %1144 = vst [vmem:[#allocation3 + $0x18] sm:$0xff] %v1118
    %1145 = vst [vmem:[#allocation3 + $0x20] sm:$0xff] %v1123
    %1146 = vst [vmem:[#allocation3 + $0x28] sm:$0xff] %v1128
    %1147 = vst [vmem:[#allocation3 + $0x30] sm:$0xff] %v1133
    %1148 = vst [vmem:[#allocation3 + $0x38] sm:$0xff] %v1138
    // Predicated region
    $region26: #{tpu_custom_call.1} parent=1 // pred_check
      _
    $region27: #{tpu_custom_call.1} parent=1 // pred_check_branch
      %1150 = sbr.rel (0) target = $region29
    $region28: #{tpu_custom_call.1} parent=1 // pred_region
      %s1152 = ssub.s32 1024, 1024
      %1153 = vsyncadd [#allocation4], %s1152
      %s1154 = sshll.u32 [#allocation3], 4
      %s1155 = int_to_ptr.vmem [resolvable:$true] %s1154
      %1160 = dma.vmem_to_hbm [thread:$0]  %s1155, 1024, %s6, [#allocation4], 128, 128, 8
    $region29: #{tpu_custom_call.1} parent=1 // pred_fallthru
      _
    // Predicated region
    $region30: #{tpu_custom_call.1} parent=1 // pred_check
      _
    $region31: #{tpu_custom_call.1} parent=1 // pred_check_branch
      %1162 = sbr.rel (0) target = $region33
    $region32: #{tpu_custom_call.1} parent=1 // pred_region
      %1163 = dma.done [#allocation4], 1024
    $region33: #{tpu_custom_call.1} parent=1 // pred_fallthru
      _
    %1164 = vsyncpa [#allocation4], 1

</llo_original>
